<compile_context>
chip_gen: v7x
topology: tpu7x:2x2x1
jax: 0.10.0
libtpu: 0.0.40
codegen_flags: <defaults>
</compile_context>

<pallas_src>
import jax
import jax.numpy as jnp
from jax.experimental import pallas as pl
from jax.experimental.pallas import tpu as pltpu

# ----------------------------- model sizes -----------------------------------
B = 2            # batch
BPAD = 8         # sublane-padded batch rows fed to the kernel
ST, DT = 1, 32   # text  seq len (dst_len for avg_pool alignment), text feature dim
SA, DA = 24, 16  # audio seq len, audio feature dim
SV, DV = 16, 20  # video seq len, video feature dim
H = 32           # hidden dim for every SubNet
P = 32           # post_fusion_dim
OUT = 1          # regression output

F = 128          # lane-dense packed feature width
NL = 6           # fused layer count: 3 block-diag subnet layers + 3 post-fusion

OFF_A = 0
OFF_V = DA               # 16
OFF_T = DA + DV          # 36


# ----------------------------- Pallas kernel ---------------------------------
def amio_lf_dnn_kernel(xs_ref, w_ref, b_ref, out_ref):
    # xs_ref: (BPAD, F) bf16 -- time-summed, BN/mean folded into layer-0 weights.
    # w_ref : (NL, F, F) bf16 block-structured weight slab.
    # b_ref : (NL, F) f32 bias slab.
    h = xs_ref[...]                                      # (BPAD, F) bf16
    for li in range(NL):                                 # static unrolled chain
        acc = jnp.dot(h, w_ref[li],                      # bf16 x bf16 -> f32 acc
                      preferred_element_type=jnp.float32)
        z = acc + b_ref[pl.ds(li, 1), :]                 # (BPAD, F) f32
        if li < NL - 1:
            h = jnp.maximum(z, 0.0).astype(jnp.bfloat16)
        else:
            out_ref[...] = z                             # f32; [:B, :OUT] is valid


# ----------------------------- parameter init --------------------------------
def _linear_params(key, fan_in, fan_out):
    """PyTorch nn.Linear-style uniform init; weight stored as (in, out)."""
    k_w, k_b = jax.random.split(key)
    bound = 1.0 / float(fan_in) ** 0.5
    w = jax.random.uniform(k_w, (fan_in, fan_out), jnp.float32, -bound, bound)
    b = jax.random.uniform(k_b, (1, fan_out), jnp.float32, -bound, bound)
    return w, b


def _bn_affine(key, dim):
    """Deterministic BatchNorm1d(eval) stats, folded into scale/shift."""
    k1, k2, k3, k4 = jax.random.split(key, 4)
    gamma = 1.0 + 0.1 * jax.random.normal(k1, (1, dim), jnp.float32)
    beta = 0.05 * jax.random.normal(k2, (1, dim), jnp.float32)
    mean = 0.05 * jax.random.normal(k3, (1, dim), jnp.float32)
    var = 1.0 + 0.1 * jax.random.uniform(k4, (1, dim), jnp.float32)
    scale = gamma * jax.lax.rsqrt(var + 1e-5)
    shift = beta - mean * scale
    return scale, shift


def make_params(key):
    keys = jax.random.split(key, 16)

    def subnet_params(kbn, k1, k2, k3, in_dim, hid):
        scale, shift = _bn_affine(kbn, in_dim)
        w1, b1 = _linear_params(k1, in_dim, hid)
        w2, b2 = _linear_params(k2, hid, hid)
        w3, b3 = _linear_params(k3, hid, hid)
        return [scale, shift, w1, b1, w2, b2, w3, b3]

    params = []
    params += subnet_params(keys[0], keys[1], keys[2], keys[3], DA, H)    # audio
    params += subnet_params(keys[4], keys[5], keys[6], keys[7], DV, H)    # video
    params += subnet_params(keys[8], keys[9], keys[10], keys[11], DT, H)  # text
    pw1, pb1 = _linear_params(keys[12], 3 * H, P)
    pw2, pb2 = _linear_params(keys[13], P, P)
    pw3, pb3 = _linear_params(keys[14], P, OUT)
    params += [pw1, pb1, pw2, pb2, pw3, pb3]
    return params


# ------------------- model-load-time packing (runs ONCE) ----------------------
def pack_params(params):
    """Fold BN affine + 1/seq_len mean into layer 0; build block-diagonal slabs.

    Called once at model-load time; the resulting slabs are plain device arrays
    passed to the jitted forward (never re-materialized per call).
    Returns (W bf16 (NL,F,F), bias f32 (NL,F)).
    """
    (a_scale, a_shift, a_w1, a_b1, a_w2, a_b2, a_w3, a_b3,
     v_scale, v_shift, v_w1, v_b1, v_w2, v_b2, v_w3, v_b3,
     t_scale, t_shift, t_w1, t_b1, t_w2, t_b2, t_w3, t_b3,
     p_w1, p_b1, p_w2, p_b2, p_w3, p_b3) = params

    W = jnp.zeros((NL, F, F), jnp.float32)
    bias = jnp.zeros((NL, F), jnp.float32)

    def fold_layer1(scale, shift, w1, b1, inv_len):
        # (x_mean * scale + shift) @ w1 + b1
        #   == x_sum @ (diag(scale * inv_len) @ w1) + (shift @ w1 + b1)
        w = (scale[0] * inv_len)[:, None] * w1
        b = (shift @ w1 + b1)[0]
        return w, b

    aw1, ab1 = fold_layer1(a_scale, a_shift, a_w1, a_b1, 1.0 / SA)
    vw1, vb1 = fold_layer1(v_scale, v_shift, v_w1, v_b1, 1.0 / SV)
    tw1, tb1 = fold_layer1(t_scale, t_shift, t_w1, t_b1, 1.0 / ST)

    # Layer 0: folded BN/mean + first Linear, block-structured.
    W = W.at[0, OFF_A:OFF_A + DA, 0:H].set(aw1)
    W = W.at[0, OFF_V:OFF_V + DV, H:2 * H].set(vw1)
    W = W.at[0, OFF_T:OFF_T + DT, 2 * H:3 * H].set(tw1)
    bias = bias.at[0, 0:H].set(ab1)
    bias = bias.at[0, H:2 * H].set(vb1)
    bias = bias.at[0, 2 * H:3 * H].set(tb1)

    # Layers 1, 2: block-diagonal per-modality Linear layers.
    for li, blocks in ((1, (a_w2, a_b2, v_w2, v_b2, t_w2, t_b2)),
                       (2, (a_w3, a_b3, v_w3, v_b3, t_w3, t_b3))):
        aw, ab, vw, vb, tw, tb = blocks
        W = W.at[li, 0:H, 0:H].set(aw)
        W = W.at[li, H:2 * H, H:2 * H].set(vw)
        W = W.at[li, 2 * H:3 * H, 2 * H:3 * H].set(tw)
        bias = bias.at[li, 0:H].set(ab[0])
        bias = bias.at[li, H:2 * H].set(vb[0])
        bias = bias.at[li, 2 * H:3 * H].set(tb[0])

    # Layers 3-5: post-fusion MLP (layer-3 input is already [audio|video|text]).
    W = W.at[3, 0:3 * H, 0:P].set(p_w1)
    bias = bias.at[3, 0:P].set(p_b1[0])
    W = W.at[4, 0:P, 0:P].set(p_w2)
    bias = bias.at[4, 0:P].set(p_b2[0])
    W = W.at[5, 0:P, 0:OUT].set(p_w3)
    bias = bias.at[5, 0:OUT].set(p_b3[0])
    return W.astype(jnp.bfloat16), bias


# ----------------------------- per-call input packing -------------------------
def pack_inputs(text_x, audio_x, video_x):
    """Pre-reduce time on the JAX side: one time-summed, lane-dense bf16 slab.

    AlignSubNet('avg_pool') + LF_DNN squeeze(1) reduce each modality to its time
    mean; the 1/seq_len factor lives in the layer-0 weights, so only the sum is
    needed here.  Shrinks the activation DMA from (BPAD, 24, 128) to (BPAD, 128).
    """
    xs = jnp.zeros((BPAD, F), jnp.float32)
    xs = xs.at[:B, OFF_A:OFF_A + DA].set(jnp.sum(audio_x, axis=1))
    xs = xs.at[:B, OFF_V:OFF_V + DV].set(jnp.sum(video_x, axis=1))
    xs = xs.at[:B, OFF_T:OFF_T + DT].set(jnp.sum(text_x, axis=1))
    return xs.astype(jnp.bfloat16)


# ----------------------------- wrapper ----------------------------------------
_COST = pl.CostEstimate(
    flops=2 * NL * BPAD * F * F,                       # ~1.6 MFLOP
    transcendentals=0,
    bytes_accessed=(BPAD * F * 2                       # xs  (bf16)
                    + NL * F * F * 2                   # W   (bf16)
                    + NL * F * 4                       # bias (f32)
                    + BPAD * F * 4),                   # out (f32)
)


@jax.jit
def amio_forward(text_x, audio_x, video_x, W, bias):
    """W/bias are the pre-packed (model-load-time) slabs from pack_params."""
    xs = pack_inputs(text_x, audio_x, video_x)

    vmem = pl.BlockSpec(memory_space=pltpu.MemorySpace.VMEM)
    out = pl.pallas_call(
        amio_lf_dnn_kernel,
        out_shape=jax.ShapeDtypeStruct((BPAD, F), jnp.float32),
        in_specs=[vmem, vmem, vmem],
        out_specs=vmem,
        cost_estimate=_COST,
    )(xs, W, bias)
    return {"M": out[:B, :OUT]}   # LF_DNN returns {'M': output}


# ----------------------------- pure-JAX reference -----------------------------
def amio_reference(text_x, audio_x, video_x, params):
    (a_scale, a_shift, a_w1, a_b1, a_w2, a_b2, a_w3, a_b3,
     v_scale, v_shift, v_w1, v_b1, v_w2, v_b2, v_w3, v_b3,
     t_scale, t_shift, t_w1, t_b1, t_w2, t_b2, t_w3, t_b3,
     p_w1, p_b1, p_w2, p_b2, p_w3, p_b3) = params

    audio = jnp.mean(audio_x, axis=1)
    video = jnp.mean(video_x, axis=1)
    text = text_x[:, 0, :]

    def subnet(x, scale, shift, w1, b1, w2, b2, w3, b3):
        h = x * scale + shift
        h = jax.nn.relu(h @ w1 + b1)
        h = jax.nn.relu(h @ w2 + b2)
        h = jax.nn.relu(h @ w3 + b3)
        return h

    ah = subnet(audio, a_scale, a_shift, a_w1, a_b1, a_w2, a_b2, a_w3, a_b3)
    vh = subnet(video, v_scale, v_shift, v_w1, v_b1, v_w2, v_b2, v_w3, v_b3)
    th = subnet(text, t_scale, t_shift, t_w1, t_b1, t_w2, t_b2, t_w3, t_b3)
    fusion = jnp.concatenate([ah, vh, th], axis=-1)
    x = jax.nn.relu(fusion @ p_w1 + p_b1)
    x = jax.nn.relu(x @ p_w2 + p_b2)
    return x @ p_w3 + p_b3


# ----------------------------- main -------------------------------------------
if __name__ == "__main__":
    key = jax.random.PRNGKey(0)
    k_t, k_a, k_v, k_p = jax.random.split(key, 4)

    text_x = jax.random.normal(k_t, (B, ST, DT), jnp.float32)
    audio_x = jax.random.normal(k_a, (B, SA, DA), jnp.float32)
    video_x = jax.random.normal(k_v, (B, SV, DV), jnp.float32)
    params = make_params(k_p)

    # Model-load-time packing: built once, outside the per-call jit.
    W, bias = pack_params(params)
    W = jax.device_put(W)
    bias = jax.device_put(bias)

    out = amio_forward(text_x, audio_x, video_x, W, bias)
    out_m = jax.block_until_ready(out["M"])

    ref = amio_reference(text_x, audio_x, video_x, params)
    assert out_m.shape == (B, OUT)
    # bf16 MXU operands with f32 accumulation -> loosened tolerance vs f32 reference.
    assert jnp.allclose(out_m, ref, rtol=5e-2, atol=2e-2), (out_m, ref)

    # TODO(synk): AMIO dispatches to ~25 different sub-models; only the
    # ('lf_dnn' + AlignSubNet('avg_pool')) configuration is implemented here.
    print("KERNEL_OK")
</pallas_src>

<mosaic_0001>
module attributes {stable_mosaic.version = 11 : i64} {
  func.func @amio_lf_dnn_kernel(%arg0: memref<8x128xbf16, #tpu.memory_space<vmem>>, %arg1: memref<6x128x128xbf16, #tpu.memory_space<vmem>>, %arg2: memref<6x128xf32, #tpu.memory_space<vmem>>, %arg3: memref<8x128xf32, #tpu.memory_space<vmem>>) attributes {dimension_semantics = [], scalar_prefetch = 0 : i64, scratch_operands = 0 : i64, tpu.core_type = #tpu.core_type<tc>} {
    %c0 = arith.constant 0 : index
    %c0_0 = arith.constant 0 : index
    %0 = vector.load %arg0[%c0, %c0_0] : memref<8x128xbf16, #tpu.memory_space<vmem>>, vector<8x128xbf16>
    %c0_1 = arith.constant 0 : index
    %c0_2 = arith.constant 0 : index
    %c0_3 = arith.constant 0 : index
    %1 = vector.load %arg1[%c0_1, %c0_2, %c0_3] : memref<6x128x128xbf16, #tpu.memory_space<vmem>>, vector<1x128x128xbf16>
    %2 = vector.shape_cast %1 : vector<1x128x128xbf16> to vector<128x128xbf16>
    %cst = arith.constant dense<0.000000e+00> : vector<8x128xf32>
    %3 = tpu.matmul %0, %2, %cst {dimension_numbers = #tpu.dot_dimension_numbers<[1], [0], [0], [1], [0, 0, 1, 1], [], []>} : vector<8x128xbf16>, vector<128x128xbf16>, vector<8x128xf32> -> vector<8x128xf32>
    %c0_4 = arith.constant 0 : index
    %c0_5 = arith.constant 0 : index
    %4 = vector.load %arg2[%c0_4, %c0_5] : memref<6x128xf32, #tpu.memory_space<vmem>>, vector<1x128xf32>
    %5 = vector.broadcast %4 : vector<1x128xf32> to vector<8x128xf32>
    %6 = arith.addf %3, %5 : vector<8x128xf32>
    %cst_6 = arith.constant 0.000000e+00 : f32
    %7 = vector.broadcast %cst_6 : f32 to vector<8x128xf32>
    %8 = arith.maximumf %6, %7 : vector<8x128xf32>
    %9 = arith.truncf %8 : vector<8x128xf32> to vector<8x128xbf16>
    %c1 = arith.constant 1 : index
    %c0_7 = arith.constant 0 : index
    %c0_8 = arith.constant 0 : index
    %10 = vector.load %arg1[%c1, %c0_7, %c0_8] : memref<6x128x128xbf16, #tpu.memory_space<vmem>>, vector<1x128x128xbf16>
    %11 = vector.shape_cast %10 : vector<1x128x128xbf16> to vector<128x128xbf16>
    %cst_9 = arith.constant dense<0.000000e+00> : vector<8x128xf32>
    %12 = tpu.matmul %9, %11, %cst_9 {dimension_numbers = #tpu.dot_dimension_numbers<[1], [0], [0], [1], [0, 0, 1, 1], [], []>} : vector<8x128xbf16>, vector<128x128xbf16>, vector<8x128xf32> -> vector<8x128xf32>
    %c1_10 = arith.constant 1 : index
    %c0_11 = arith.constant 0 : index
    %13 = vector.load %arg2[%c1_10, %c0_11] : memref<6x128xf32, #tpu.memory_space<vmem>>, vector<1x128xf32>
    %14 = vector.broadcast %13 : vector<1x128xf32> to vector<8x128xf32>
    %15 = arith.addf %12, %14 : vector<8x128xf32>
    %cst_12 = arith.constant 0.000000e+00 : f32
    %16 = vector.broadcast %cst_12 : f32 to vector<8x128xf32>
    %17 = arith.maximumf %15, %16 : vector<8x128xf32>
    %18 = arith.truncf %17 : vector<8x128xf32> to vector<8x128xbf16>
    %c2 = arith.constant 2 : index
    %c0_13 = arith.constant 0 : index
    %c0_14 = arith.constant 0 : index
    %19 = vector.load %arg1[%c2, %c0_13, %c0_14] : memref<6x128x128xbf16, #tpu.memory_space<vmem>>, vector<1x128x128xbf16>
    %20 = vector.shape_cast %19 : vector<1x128x128xbf16> to vector<128x128xbf16>
    %cst_15 = arith.constant dense<0.000000e+00> : vector<8x128xf32>
    %21 = tpu.matmul %18, %20, %cst_15 {dimension_numbers = #tpu.dot_dimension_numbers<[1], [0], [0], [1], [0, 0, 1, 1], [], []>} : vector<8x128xbf16>, vector<128x128xbf16>, vector<8x128xf32> -> vector<8x128xf32>
    %c2_16 = arith.constant 2 : index
    %c0_17 = arith.constant 0 : index
    %22 = vector.load %arg2[%c2_16, %c0_17] : memref<6x128xf32, #tpu.memory_space<vmem>>, vector<1x128xf32>
    %23 = vector.broadcast %22 : vector<1x128xf32> to vector<8x128xf32>
    %24 = arith.addf %21, %23 : vector<8x128xf32>
    %cst_18 = arith.constant 0.000000e+00 : f32
    %25 = vector.broadcast %cst_18 : f32 to vector<8x128xf32>
    %26 = arith.maximumf %24, %25 : vector<8x128xf32>
    %27 = arith.truncf %26 : vector<8x128xf32> to vector<8x128xbf16>
    %c3 = arith.constant 3 : index
    %c0_19 = arith.constant 0 : index
    %c0_20 = arith.constant 0 : index
    %28 = vector.load %arg1[%c3, %c0_19, %c0_20] : memref<6x128x128xbf16, #tpu.memory_space<vmem>>, vector<1x128x128xbf16>
    %29 = vector.shape_cast %28 : vector<1x128x128xbf16> to vector<128x128xbf16>
    %cst_21 = arith.constant dense<0.000000e+00> : vector<8x128xf32>
    %30 = tpu.matmul %27, %29, %cst_21 {dimension_numbers = #tpu.dot_dimension_numbers<[1], [0], [0], [1], [0, 0, 1, 1], [], []>} : vector<8x128xbf16>, vector<128x128xbf16>, vector<8x128xf32> -> vector<8x128xf32>
    %c3_22 = arith.constant 3 : index
    %c0_23 = arith.constant 0 : index
    %31 = vector.load %arg2[%c3_22, %c0_23] : memref<6x128xf32, #tpu.memory_space<vmem>>, vector<1x128xf32>
    %32 = vector.broadcast %31 : vector<1x128xf32> to vector<8x128xf32>
    %33 = arith.addf %30, %32 : vector<8x128xf32>
    %cst_24 = arith.constant 0.000000e+00 : f32
    %34 = vector.broadcast %cst_24 : f32 to vector<8x128xf32>
    %35 = arith.maximumf %33, %34 : vector<8x128xf32>
    %36 = arith.truncf %35 : vector<8x128xf32> to vector<8x128xbf16>
    %c4 = arith.constant 4 : index
    %c0_25 = arith.constant 0 : index
    %c0_26 = arith.constant 0 : index
    %37 = vector.load %arg1[%c4, %c0_25, %c0_26] : memref<6x128x128xbf16, #tpu.memory_space<vmem>>, vector<1x128x128xbf16>
    %38 = vector.shape_cast %37 : vector<1x128x128xbf16> to vector<128x128xbf16>
    %cst_27 = arith.constant dense<0.000000e+00> : vector<8x128xf32>
    %39 = tpu.matmul %36, %38, %cst_27 {dimension_numbers = #tpu.dot_dimension_numbers<[1], [0], [0], [1], [0, 0, 1, 1], [], []>} : vector<8x128xbf16>, vector<128x128xbf16>, vector<8x128xf32> -> vector<8x128xf32>
    %c4_28 = arith.constant 4 : index
    %c0_29 = arith.constant 0 : index
    %40 = vector.load %arg2[%c4_28, %c0_29] : memref<6x128xf32, #tpu.memory_space<vmem>>, vector<1x128xf32>
    %41 = vector.broadcast %40 : vector<1x128xf32> to vector<8x128xf32>
    %42 = arith.addf %39, %41 : vector<8x128xf32>
    %cst_30 = arith.constant 0.000000e+00 : f32
    %43 = vector.broadcast %cst_30 : f32 to vector<8x128xf32>
    %44 = arith.maximumf %42, %43 : vector<8x128xf32>
    %45 = arith.truncf %44 : vector<8x128xf32> to vector<8x128xbf16>
    %c5 = arith.constant 5 : index
    %c0_31 = arith.constant 0 : index
    %c0_32 = arith.constant 0 : index
    %46 = vector.load %arg1[%c5, %c0_31, %c0_32] : memref<6x128x128xbf16, #tpu.memory_space<vmem>>, vector<1x128x128xbf16>
    %47 = vector.shape_cast %46 : vector<1x128x128xbf16> to vector<128x128xbf16>
    %cst_33 = arith.constant dense<0.000000e+00> : vector<8x128xf32>
    %48 = tpu.matmul %45, %47, %cst_33 {dimension_numbers = #tpu.dot_dimension_numbers<[1], [0], [0], [1], [0, 0, 1, 1], [], []>} : vector<8x128xbf16>, vector<128x128xbf16>, vector<8x128xf32> -> vector<8x128xf32>
    %c5_34 = arith.constant 5 : index
    %c0_35 = arith.constant 0 : index
    %49 = vector.load %arg2[%c5_34, %c0_35] : memref<6x128xf32, #tpu.memory_space<vmem>>, vector<1x128xf32>
    %50 = vector.broadcast %49 : vector<1x128xf32> to vector<8x128xf32>
    %51 = arith.addf %48, %50 : vector<8x128xf32>
    %c0_36 = arith.constant 0 : index
    %c0_37 = arith.constant 0 : index
    %52 = vector.load %arg3[%c0_36, %c0_37] : memref<8x128xf32, #tpu.memory_space<vmem>>, vector<8x128xf32>
    tpu.vector_store %arg3[%c0_36, %c0_37], %51 {strides = array<i32>} : memref<8x128xf32, #tpu.memory_space<vmem>>, vector<8x128xf32>,
    return
  }
}

</mosaic_0001>

<llo_original>
// kernel: amio_forward.1
$region0: #{amio_forward.1}
  #allocation0 [shape = 'u32[]', space=smem, size = 0x4, offset = 0x4, fixed_abs, tag = 'smem constant byte address 0x4 - core index']
  #allocation1 [shape = 'u32[144,128]{1,0:T(1,128)}', space=vmem, size = 0x12000, scoped, tag = 'internal scratch']
  %s0 = inlined_call_operand.vmem [shape: bf16[8,128], index: 0, kind: input, shape index: {}]
  %s1 = inlined_call_operand.hbm [shape: bf16[6,128,128], index: 1, kind: input, shape index: {}]
  %s2 = inlined_call_operand.vmem [shape: f32[6,128], index: 2, kind: input, shape index: {}]
  %s3 = inlined_call_operand.vmem [shape: f32[8,128], index: 3, kind: output, shape index: {}]
  %s4 = sld [smem:[#allocation0]]
  $region26: #{amio_forward.1} parent=0
    _
  %s6 = ssub.s32 1, %s4
  %s7 = scalar_select 0, %s6, %s4
  $region1: #{amio_forward.1} parent=0
    #allocation2 [shape = 'u8[196608]{0}', space=vmem, size = 0x30000, scoped, tag = 'input window, operand 1, single buffered']
    #allocation3 [shape = 's32[1]{0}', space=sflag, size = 0x4, scoped, tag = 'scoped memory for amio_forward.1']
    %8 = vsyncpa [#allocation3], 0
    // Predicated region
    $region2: #{amio_forward.1} parent=1 // pred_check
      _
    $region3: #{amio_forward.1} parent=1 // pred_check_branch
      %10 = sbr.rel (0) target = $region5
    $region4: #{amio_forward.1} parent=1 // pred_region
      _
    $region5: #{amio_forward.1} parent=1 // pred_fallthru
      _
    // Predicated region
    $region6: #{amio_forward.1} parent=1 // pred_check
      _
    $region7: #{amio_forward.1} parent=1 // pred_check_branch
      %12 = sbr.rel (0) target = $region9
    $region8: #{amio_forward.1} parent=1 // pred_region
      %s14 = ssub.s32 6144, 6144
      %15 = vsyncadd [#allocation3], %s14
      %s16 = sshll.u32 [#allocation2], 4
      %s17 = int_to_ptr.vmem [resolvable:$true] %s16
      %22 = dma.hbm_to_vmem [thread:$0]  %s1, 6144, %s17, [#allocation3], 64, 64, 4
    $region9: #{amio_forward.1} parent=1 // pred_fallthru
      _
    // Predicated region
    $region10: #{amio_forward.1} parent=1 // pred_check
      _
    $region11: #{amio_forward.1} parent=1 // pred_check_branch
      %24 = sbr.rel (0) target = $region13
    $region12: #{amio_forward.1} parent=1 // pred_region
      _
    $region13: #{amio_forward.1} parent=1 // pred_fallthru
      _
    // Predicated region
    $region14: #{amio_forward.1} parent=1 // pred_check
      _
    $region15: #{amio_forward.1} parent=1 // pred_check_branch
      %26 = sbr.rel (0) target = $region17
    $region16: #{amio_forward.1} parent=1 // pred_region
      %27 = dma.done [#allocation3], 6144
    $region17: #{amio_forward.1} parent=1 // pred_fallthru
      _
    %v29 = vld [vmem:[%s0] sm:$0xf]
    %v30 = vld [vmem:[#allocation2] sm:$0xf]
    %v31 = vld [vmem:[#allocation2 + $0x4] sm:$0xf]
    %v32 = vld [vmem:[#allocation2 + $0x8] sm:$0xf]
    %v33 = vld [vmem:[#allocation2 + $0xc] sm:$0xf]
    %v34 = vld [vmem:[#allocation2 + $0x10] sm:$0xf]
    %v35 = vld [vmem:[#allocation2 + $0x14] sm:$0xf]
    %v36 = vld [vmem:[#allocation2 + $0x18] sm:$0xf]
    %v37 = vld [vmem:[#allocation2 + $0x1c] sm:$0xf]
    %v38 = vld [vmem:[#allocation2 + $0x20] sm:$0xf]
    %v39 = vld [vmem:[#allocation2 + $0x24] sm:$0xf]
    %v40 = vld [vmem:[#allocation2 + $0x28] sm:$0xf]
    %v41 = vld [vmem:[#allocation2 + $0x2c] sm:$0xf]
    %v42 = vld [vmem:[#allocation2 + $0x30] sm:$0xf]
    %v43 = vld [vmem:[#allocation2 + $0x34] sm:$0xf]
    %v44 = vld [vmem:[#allocation2 + $0x38] sm:$0xf]
    %v45 = vld [vmem:[#allocation2 + $0x3c] sm:$0xf]
    %v46 = vld [vmem:[%s2] sm:$0x1]
    %v47 = vlaneseq
    %v48 = vshrl.u32 %v47, 7
    %v49 = vsub.s32 0, %v48
    %v50 = vrot.slane %v46, %v49
    %v67 = vunpack.c.l.b16 %v30
    %v68 = vunpack.c.l.b16 %v31
    %v69 = vunpack.c.l.b16 %v32
    %v70 = vunpack.c.l.b16 %v33
    %v71 = vunpack.c.l.b16 %v34
    %v72 = vunpack.c.l.b16 %v35
    %v73 = vunpack.c.l.b16 %v36
    %v74 = vunpack.c.l.b16 %v37
    %v75 = vunpack.c.l.b16 %v38
    %v76 = vunpack.c.l.b16 %v39
    %v77 = vunpack.c.l.b16 %v40
    %v78 = vunpack.c.l.b16 %v41
    %v79 = vunpack.c.l.b16 %v42
    %v80 = vunpack.c.l.b16 %v43
    %v81 = vunpack.c.l.b16 %v44
    %v82 = vunpack.c.l.b16 %v45
    %v83 = vpack.c.b16 %v68, %v67
    %v84 = vpack.c.b16 %v70, %v69
    %v85 = vpack.c.b16 %v72, %v71
    %v86 = vpack.c.b16 %v74, %v73
    %v87 = vpack.c.b16 %v76, %v75
    %v88 = vpack.c.b16 %v78, %v77
    %v89 = vpack.c.b16 %v80, %v79
    %v90 = vpack.c.b16 %v82, %v81
    %99 = vmatprep.subr.bf16.mxu0 0
    %100 = vmatpush1.bf16.msra.mxu0 %v83
    %101 = vmatprep.subr.bf16.mxu0 0
    %102 = vmatpush1.bf16.msra.mxu0 %v84
    %103 = vmatprep.subr.bf16.mxu0 0
    %104 = vmatpush1.bf16.msra.mxu0 %v85
    %105 = vmatprep.subr.bf16.mxu0 0
    %106 = vmatpush1.bf16.msra.mxu0 %v86
    %107 = vmatprep.subr.bf16.mxu0 0
    %108 = vmatpush1.bf16.msra.mxu0 %v87
    %109 = vmatprep.subr.bf16.mxu0 0
    %110 = vmatpush1.bf16.msra.mxu0 %v88
    %111 = vmatprep.subr.bf16.mxu0 0
    %112 = vmatpush1.bf16.msra.mxu0 %v89
    %113 = vmatprep.subr.bf16.mxu0 0
    %114 = vmatpush1.bf16.msra.mxu0 %v90
    %115 = vmatprep.subr.bf16.mxu0 0
    %116 = vmatpush1.bf16.msra.mxu0 0
    %117 = vmatprep.subr.bf16.mxu0 0
    %118 = vmatpush1.bf16.msra.mxu0 0
    %119 = vmatprep.subr.bf16.mxu0 0
    %120 = vmatpush1.bf16.msra.mxu0 0
    %121 = vmatprep.subr.bf16.mxu0 0
    %122 = vmatpush1.bf16.msra.mxu0 0
    %123 = vmatprep.subr.bf16.mxu0 0
    %124 = vmatpush1.bf16.msra.mxu0 0
    %125 = vmatprep.subr.bf16.mxu0 0
    %126 = vmatpush1.bf16.msra.mxu0 0
    %127 = vmatprep.subr.bf16.mxu0 0
    %128 = vmatpush1.bf16.msra.mxu0 0
    %129 = vmatprep.subr.bf16.mxu0 0
    %130 = vmatpush1.bf16.msra.mxu0 0
    %131 = vmatprep.mubr.bf16.mxu0 0
    %132 = vmatmul.mubr.bf16.gmra.mrb[0].mxu0 %v29
    %v133 = vpop.f32.mrb[0].mxu0
    %v134 = vadd.f32 %v50, %v133
    %v135 = vpop.f32.mrb[0].mxu0
    %v136 = vpop.f32.mrb[0].mxu0
    %v137 = vpop.f32.mrb[0].mxu0
    %138 = vdwg.mxu0
    %v139 = vmax.f32 %v134, 0.0
    %v140 = vpack.c.bf16 %v139, %v139
    %s141 = scalar_lea.vmem [#allocation2], 64
    %v142 = vld [vmem:[%s141] sm:$0xf]
    %v143 = vld [vmem:[%s141 + $0x4] sm:$0xf]
    %v144 = vld [vmem:[%s141 + $0x8] sm:$0xf]
    %v145 = vld [vmem:[%s141 + $0xc] sm:$0xf]
    %v146 = vld [vmem:[%s141 + $0x10] sm:$0xf]
    %v147 = vld [vmem:[%s141 + $0x14] sm:$0xf]
    %v148 = vld [vmem:[%s141 + $0x18] sm:$0xf]
    %v149 = vld [vmem:[%s141 + $0x1c] sm:$0xf]
    %v150 = vld [vmem:[%s141 + $0x20] sm:$0xf]
    %v151 = vld [vmem:[%s141 + $0x24] sm:$0xf]
    %v152 = vld [vmem:[%s141 + $0x28] sm:$0xf]
    %v153 = vld [vmem:[%s141 + $0x2c] sm:$0xf]
    %v154 = vld [vmem:[%s141 + $0x30] sm:$0xf]
    %v155 = vld [vmem:[%s141 + $0x34] sm:$0xf]
    %v156 = vld [vmem:[%s141 + $0x38] sm:$0xf]
    %v157 = vld [vmem:[%s141 + $0x3c] sm:$0xf]
    %v158 = vld [vmem:[%s2 + $0x1] sm:$0x1]
    %v159 = vlaneseq
    %v160 = vshrl.u32 %v159, 7
    %v161 = vsub.s32 0, %v160
    %v162 = vrot.slane %v158, %v161
    %v179 = vunpack.c.l.b16 %v142
    %v180 = vunpack.c.l.b16 %v143
    %v181 = vunpack.c.l.b16 %v144
    %v182 = vunpack.c.l.b16 %v145
    %v183 = vunpack.c.l.b16 %v146
    %v184 = vunpack.c.l.b16 %v147
    %v185 = vunpack.c.l.b16 %v148
    %v186 = vunpack.c.l.b16 %v149
    %v187 = vunpack.c.l.b16 %v150
    %v188 = vunpack.c.l.b16 %v151
    %v189 = vunpack.c.l.b16 %v152
    %v190 = vunpack.c.l.b16 %v153
    %v191 = vunpack.c.l.b16 %v154
    %v192 = vunpack.c.l.b16 %v155
    %v193 = vunpack.c.l.b16 %v156
    %v194 = vunpack.c.l.b16 %v157
    %v195 = vpack.c.b16 %v180, %v179
    %v196 = vpack.c.b16 %v182, %v181
    %v197 = vpack.c.b16 %v184, %v183
    %v198 = vpack.c.b16 %v186, %v185
    %v199 = vpack.c.b16 %v188, %v187
    %v200 = vpack.c.b16 %v190, %v189
    %v201 = vpack.c.b16 %v192, %v191
    %v202 = vpack.c.b16 %v194, %v193
    %211 = vmatprep.subr.bf16.mxu0 0
    %212 = vmatpush1.bf16.msra.mxu0 %v195
    %213 = vmatprep.subr.bf16.mxu0 0
    %214 = vmatpush1.bf16.msra.mxu0 %v196
    %215 = vmatprep.subr.bf16.mxu0 0
    %216 = vmatpush1.bf16.msra.mxu0 %v197
    %217 = vmatprep.subr.bf16.mxu0 0
    %218 = vmatpush1.bf16.msra.mxu0 %v198
    %219 = vmatprep.subr.bf16.mxu0 0
    %220 = vmatpush1.bf16.msra.mxu0 %v199
    %221 = vmatprep.subr.bf16.mxu0 0
    %222 = vmatpush1.bf16.msra.mxu0 %v200
    %223 = vmatprep.subr.bf16.mxu0 0
    %224 = vmatpush1.bf16.msra.mxu0 %v201
    %225 = vmatprep.subr.bf16.mxu0 0
    %226 = vmatpush1.bf16.msra.mxu0 %v202
    %227 = vmatprep.subr.bf16.mxu0 0
    %228 = vmatpush1.bf16.msra.mxu0 0
    %229 = vmatprep.subr.bf16.mxu0 0
    %230 = vmatpush1.bf16.msra.mxu0 0
    %231 = vmatprep.subr.bf16.mxu0 0
    %232 = vmatpush1.bf16.msra.mxu0 0
    %233 = vmatprep.subr.bf16.mxu0 0
    %234 = vmatpush1.bf16.msra.mxu0 0
    %235 = vmatprep.subr.bf16.mxu0 0
    %236 = vmatpush1.bf16.msra.mxu0 0
    %237 = vmatprep.subr.bf16.mxu0 0
    %238 = vmatpush1.bf16.msra.mxu0 0
    %239 = vmatprep.subr.bf16.mxu0 0
    %240 = vmatpush1.bf16.msra.mxu0 0
    %241 = vmatprep.subr.bf16.mxu0 0
    %242 = vmatpush1.bf16.msra.mxu0 0
    %243 = vmatprep.mubr.bf16.mxu0 0
    %244 = vmatmul.mubr.bf16.gmra.mrb[0].mxu0 %v140
    %v245 = vpop.f32.mrb[0].mxu0
    %v246 = vadd.f32 %v162, %v245
    %v247 = vpop.f32.mrb[0].mxu0
    %v248 = vpop.f32.mrb[0].mxu0
    %v249 = vpop.f32.mrb[0].mxu0
    %250 = vdwg.mxu0
    %v251 = vmax.f32 %v246, 0.0
    %v252 = vpack.c.bf16 %v251, %v251
    %s253 = scalar_lea.vmem [#allocation2], 128
    %v254 = vld [vmem:[%s253] sm:$0xf]
    %v255 = vld [vmem:[%s253 + $0x4] sm:$0xf]
    %v256 = vld [vmem:[%s253 + $0x8] sm:$0xf]
    %v257 = vld [vmem:[%s253 + $0xc] sm:$0xf]
    %v258 = vld [vmem:[%s253 + $0x10] sm:$0xf]
    %v259 = vld [vmem:[%s253 + $0x14] sm:$0xf]
    %v260 = vld [vmem:[%s253 + $0x18] sm:$0xf]
    %v261 = vld [vmem:[%s253 + $0x1c] sm:$0xf]
    %v262 = vld [vmem:[%s253 + $0x20] sm:$0xf]
    %v263 = vld [vmem:[%s253 + $0x24] sm:$0xf]
    %v264 = vld [vmem:[%s253 + $0x28] sm:$0xf]
    %v265 = vld [vmem:[%s253 + $0x2c] sm:$0xf]
    %v266 = vld [vmem:[%s253 + $0x30] sm:$0xf]
    %v267 = vld [vmem:[%s253 + $0x34] sm:$0xf]
    %v268 = vld [vmem:[%s253 + $0x38] sm:$0xf]
    %v269 = vld [vmem:[%s253 + $0x3c] sm:$0xf]
    %v270 = vld [vmem:[%s2 + $0x2] sm:$0x1]
    %v271 = vlaneseq
    %v272 = vshrl.u32 %v271, 7
    %v273 = vsub.s32 0, %v272
    %v274 = vrot.slane %v270, %v273
    %v291 = vunpack.c.l.b16 %v254
    %v292 = vunpack.c.l.b16 %v255
    %v293 = vunpack.c.l.b16 %v256
    %v294 = vunpack.c.l.b16 %v257
    %v295 = vunpack.c.l.b16 %v258
    %v296 = vunpack.c.l.b16 %v259
    %v297 = vunpack.c.l.b16 %v260
    %v298 = vunpack.c.l.b16 %v261
    %v299 = vunpack.c.l.b16 %v262
    %v300 = vunpack.c.l.b16 %v263
    %v301 = vunpack.c.l.b16 %v264
    %v302 = vunpack.c.l.b16 %v265
    %v303 = vunpack.c.l.b16 %v266
    %v304 = vunpack.c.l.b16 %v267
    %v305 = vunpack.c.l.b16 %v268
    %v306 = vunpack.c.l.b16 %v269
    %v307 = vpack.c.b16 %v292, %v291
    %v308 = vpack.c.b16 %v294, %v293
    %v309 = vpack.c.b16 %v296, %v295
    %v310 = vpack.c.b16 %v298, %v297
    %v311 = vpack.c.b16 %v300, %v299
    %v312 = vpack.c.b16 %v302, %v301
    %v313 = vpack.c.b16 %v304, %v303
    %v314 = vpack.c.b16 %v306, %v305
    %323 = vmatprep.subr.bf16.mxu0 0
    %324 = vmatpush1.bf16.msra.mxu0 %v307
    %325 = vmatprep.subr.bf16.mxu0 0
    %326 = vmatpush1.bf16.msra.mxu0 %v308
    %327 = vmatprep.subr.bf16.mxu0 0
    %328 = vmatpush1.bf16.msra.mxu0 %v309
    %329 = vmatprep.subr.bf16.mxu0 0
    %330 = vmatpush1.bf16.msra.mxu0 %v310
    %331 = vmatprep.subr.bf16.mxu0 0
    %332 = vmatpush1.bf16.msra.mxu0 %v311
    %333 = vmatprep.subr.bf16.mxu0 0
    %334 = vmatpush1.bf16.msra.mxu0 %v312
    %335 = vmatprep.subr.bf16.mxu0 0
    %336 = vmatpush1.bf16.msra.mxu0 %v313
    %337 = vmatprep.subr.bf16.mxu0 0
    %338 = vmatpush1.bf16.msra.mxu0 %v314
    %339 = vmatprep.subr.bf16.mxu0 0
    %340 = vmatpush1.bf16.msra.mxu0 0
    %341 = vmatprep.subr.bf16.mxu0 0
    %342 = vmatpush1.bf16.msra.mxu0 0
    %343 = vmatprep.subr.bf16.mxu0 0
    %344 = vmatpush1.bf16.msra.mxu0 0
    %345 = vmatprep.subr.bf16.mxu0 0
    %346 = vmatpush1.bf16.msra.mxu0 0
    %347 = vmatprep.subr.bf16.mxu0 0
    %348 = vmatpush1.bf16.msra.mxu0 0
    %349 = vmatprep.subr.bf16.mxu0 0
    %350 = vmatpush1.bf16.msra.mxu0 0
    %351 = vmatprep.subr.bf16.mxu0 0
    %352 = vmatpush1.bf16.msra.mxu0 0
    %353 = vmatprep.subr.bf16.mxu0 0
    %354 = vmatpush1.bf16.msra.mxu0 0
    %355 = vmatprep.mubr.bf16.mxu0 0
    %356 = vmatmul.mubr.bf16.gmra.mrb[0].mxu0 %v252
    %v357 = vpop.f32.mrb[0].mxu0
    %v358 = vadd.f32 %v274, %v357
    %v359 = vpop.f32.mrb[0].mxu0
    %v360 = vpop.f32.mrb[0].mxu0
    %v361 = vpop.f32.mrb[0].mxu0
    %362 = vdwg.mxu0
    %v363 = vmax.f32 %v358, 0.0
    %v364 = vpack.c.bf16 %v363, %v363
    %s365 = scalar_lea.vmem [#allocation2], 192
    %v366 = vld [vmem:[%s365] sm:$0xf]
    %v367 = vld [vmem:[%s365 + $0x4] sm:$0xf]
    %v368 = vld [vmem:[%s365 + $0x8] sm:$0xf]
    %v369 = vld [vmem:[%s365 + $0xc] sm:$0xf]
    %v370 = vld [vmem:[%s365 + $0x10] sm:$0xf]
    %v371 = vld [vmem:[%s365 + $0x14] sm:$0xf]
    %v372 = vld [vmem:[%s365 + $0x18] sm:$0xf]
    %v373 = vld [vmem:[%s365 + $0x1c] sm:$0xf]
    %v374 = vld [vmem:[%s365 + $0x20] sm:$0xf]
    %v375 = vld [vmem:[%s365 + $0x24] sm:$0xf]
    %v376 = vld [vmem:[%s365 + $0x28] sm:$0xf]
    %v377 = vld [vmem:[%s365 + $0x2c] sm:$0xf]
    %v378 = vld [vmem:[%s365 + $0x30] sm:$0xf]
    %v379 = vld [vmem:[%s365 + $0x34] sm:$0xf]
    %v380 = vld [vmem:[%s365 + $0x38] sm:$0xf]
    %v381 = vld [vmem:[%s365 + $0x3c] sm:$0xf]
    %v382 = vld [vmem:[%s2 + $0x3] sm:$0x1]
    %v383 = vlaneseq
    %v384 = vshrl.u32 %v383, 7
    %v385 = vsub.s32 0, %v384
    %v386 = vrot.slane %v382, %v385
    %v403 = vunpack.c.l.b16 %v366
    %v404 = vunpack.c.l.b16 %v367
    %v405 = vunpack.c.l.b16 %v368
    %v406 = vunpack.c.l.b16 %v369
    %v407 = vunpack.c.l.b16 %v370
    %v408 = vunpack.c.l.b16 %v371
    %v409 = vunpack.c.l.b16 %v372
    %v410 = vunpack.c.l.b16 %v373
    %v411 = vunpack.c.l.b16 %v374
    %v412 = vunpack.c.l.b16 %v375
    %v413 = vunpack.c.l.b16 %v376
    %v414 = vunpack.c.l.b16 %v377
    %v415 = vunpack.c.l.b16 %v378
    %v416 = vunpack.c.l.b16 %v379
    %v417 = vunpack.c.l.b16 %v380
    %v418 = vunpack.c.l.b16 %v381
    %v419 = vpack.c.b16 %v404, %v403
    %v420 = vpack.c.b16 %v406, %v405
    %v421 = vpack.c.b16 %v408, %v407
    %v422 = vpack.c.b16 %v410, %v409
    %v423 = vpack.c.b16 %v412, %v411
    %v424 = vpack.c.b16 %v414, %v413
    %v425 = vpack.c.b16 %v416, %v415
    %v426 = vpack.c.b16 %v418, %v417
    %435 = vmatprep.subr.bf16.mxu0 0
    %436 = vmatpush1.bf16.msra.mxu0 %v419
    %437 = vmatprep.subr.bf16.mxu0 0
    %438 = vmatpush1.bf16.msra.mxu0 %v420
    %439 = vmatprep.subr.bf16.mxu0 0
    %440 = vmatpush1.bf16.msra.mxu0 %v421
    %441 = vmatprep.subr.bf16.mxu0 0
    %442 = vmatpush1.bf16.msra.mxu0 %v422
    %443 = vmatprep.subr.bf16.mxu0 0
    %444 = vmatpush1.bf16.msra.mxu0 %v423
    %445 = vmatprep.subr.bf16.mxu0 0
    %446 = vmatpush1.bf16.msra.mxu0 %v424
    %447 = vmatprep.subr.bf16.mxu0 0
    %448 = vmatpush1.bf16.msra.mxu0 %v425
    %449 = vmatprep.subr.bf16.mxu0 0
    %450 = vmatpush1.bf16.msra.mxu0 %v426
    %451 = vmatprep.subr.bf16.mxu0 0
    %452 = vmatpush1.bf16.msra.mxu0 0
    %453 = vmatprep.subr.bf16.mxu0 0
    %454 = vmatpush1.bf16.msra.mxu0 0
    %455 = vmatprep.subr.bf16.mxu0 0
    %456 = vmatpush1.bf16.msra.mxu0 0
    %457 = vmatprep.subr.bf16.mxu0 0
    %458 = vmatpush1.bf16.msra.mxu0 0
    %459 = vmatprep.subr.bf16.mxu0 0
    %460 = vmatpush1.bf16.msra.mxu0 0
    %461 = vmatprep.subr.bf16.mxu0 0
    %462 = vmatpush1.bf16.msra.mxu0 0
    %463 = vmatprep.subr.bf16.mxu0 0
    %464 = vmatpush1.bf16.msra.mxu0 0
    %465 = vmatprep.subr.bf16.mxu0 0
    %466 = vmatpush1.bf16.msra.mxu0 0
    %467 = vmatprep.mubr.bf16.mxu0 0
    %468 = vmatmul.mubr.bf16.gmra.mrb[0].mxu0 %v364
    %v469 = vpop.f32.mrb[0].mxu0
    %v470 = vadd.f32 %v386, %v469
    %v471 = vpop.f32.mrb[0].mxu0
    %v472 = vpop.f32.mrb[0].mxu0
    %v473 = vpop.f32.mrb[0].mxu0
    %474 = vdwg.mxu0
    %v475 = vmax.f32 %v470, 0.0
    %v476 = vpack.c.bf16 %v475, %v475
    %s477 = scalar_lea.vmem [#allocation2], 256
    %v478 = vld [vmem:[%s477] sm:$0xf]
    %v479 = vld [vmem:[%s477 + $0x4] sm:$0xf]
    %v480 = vld [vmem:[%s477 + $0x8] sm:$0xf]
    %v481 = vld [vmem:[%s477 + $0xc] sm:$0xf]
    %v482 = vld [vmem:[%s477 + $0x10] sm:$0xf]
    %v483 = vld [vmem:[%s477 + $0x14] sm:$0xf]
    %v484 = vld [vmem:[%s477 + $0x18] sm:$0xf]
    %v485 = vld [vmem:[%s477 + $0x1c] sm:$0xf]
    %v486 = vld [vmem:[%s477 + $0x20] sm:$0xf]
    %v487 = vld [vmem:[%s477 + $0x24] sm:$0xf]
    %v488 = vld [vmem:[%s477 + $0x28] sm:$0xf]
    %v489 = vld [vmem:[%s477 + $0x2c] sm:$0xf]
    %v490 = vld [vmem:[%s477 + $0x30] sm:$0xf]
    %v491 = vld [vmem:[%s477 + $0x34] sm:$0xf]
    %v492 = vld [vmem:[%s477 + $0x38] sm:$0xf]
    %v493 = vld [vmem:[%s477 + $0x3c] sm:$0xf]
    %v494 = vld [vmem:[%s2 + $0x4] sm:$0x1]
    %v495 = vlaneseq
    %v496 = vshrl.u32 %v495, 7
    %v497 = vsub.s32 0, %v496
    %v498 = vrot.slane %v494, %v497
    %v515 = vunpack.c.l.b16 %v478
    %v516 = vunpack.c.l.b16 %v479
    %v517 = vunpack.c.l.b16 %v480
    %v518 = vunpack.c.l.b16 %v481
    %v519 = vunpack.c.l.b16 %v482
    %v520 = vunpack.c.l.b16 %v483
    %v521 = vunpack.c.l.b16 %v484
    %v522 = vunpack.c.l.b16 %v485
    %v523 = vunpack.c.l.b16 %v486
    %v524 = vunpack.c.l.b16 %v487
    %v525 = vunpack.c.l.b16 %v488
    %v526 = vunpack.c.l.b16 %v489
    %v527 = vunpack.c.l.b16 %v490
    %v528 = vunpack.c.l.b16 %v491
    %v529 = vunpack.c.l.b16 %v492
    %v530 = vunpack.c.l.b16 %v493
    %v531 = vpack.c.b16 %v516, %v515
    %v532 = vpack.c.b16 %v518, %v517
    %v533 = vpack.c.b16 %v520, %v519
    %v534 = vpack.c.b16 %v522, %v521
    %v535 = vpack.c.b16 %v524, %v523
    %v536 = vpack.c.b16 %v526, %v525
    %v537 = vpack.c.b16 %v528, %v527
    %v538 = vpack.c.b16 %v530, %v529
    %547 = vmatprep.subr.bf16.mxu0 0
    %548 = vmatpush1.bf16.msra.mxu0 %v531
    %549 = vmatprep.subr.bf16.mxu0 0
    %550 = vmatpush1.bf16.msra.mxu0 %v532
    %551 = vmatprep.subr.bf16.mxu0 0
    %552 = vmatpush1.bf16.msra.mxu0 %v533
    %553 = vmatprep.subr.bf16.mxu0 0
    %554 = vmatpush1.bf16.msra.mxu0 %v534
    %555 = vmatprep.subr.bf16.mxu0 0
    %556 = vmatpush1.bf16.msra.mxu0 %v535
    %557 = vmatprep.subr.bf16.mxu0 0
    %558 = vmatpush1.bf16.msra.mxu0 %v536
    %559 = vmatprep.subr.bf16.mxu0 0
    %560 = vmatpush1.bf16.msra.mxu0 %v537
    %561 = vmatprep.subr.bf16.mxu0 0
    %562 = vmatpush1.bf16.msra.mxu0 %v538
    %563 = vmatprep.subr.bf16.mxu0 0
    %564 = vmatpush1.bf16.msra.mxu0 0
    %565 = vmatprep.subr.bf16.mxu0 0
    %566 = vmatpush1.bf16.msra.mxu0 0
    %567 = vmatprep.subr.bf16.mxu0 0
    %568 = vmatpush1.bf16.msra.mxu0 0
    %569 = vmatprep.subr.bf16.mxu0 0
    %570 = vmatpush1.bf16.msra.mxu0 0
    %571 = vmatprep.subr.bf16.mxu0 0
    %572 = vmatpush1.bf16.msra.mxu0 0
    %573 = vmatprep.subr.bf16.mxu0 0
    %574 = vmatpush1.bf16.msra.mxu0 0
    %575 = vmatprep.subr.bf16.mxu0 0
    %576 = vmatpush1.bf16.msra.mxu0 0
    %577 = vmatprep.subr.bf16.mxu0 0
    %578 = vmatpush1.bf16.msra.mxu0 0
    %579 = vmatprep.mubr.bf16.mxu0 0
    %580 = vmatmul.mubr.bf16.gmra.mrb[0].mxu0 %v476
    %v581 = vpop.f32.mrb[0].mxu0
    %v582 = vadd.f32 %v498, %v581
    %v583 = vpop.f32.mrb[0].mxu0
    %v584 = vpop.f32.mrb[0].mxu0
    %v585 = vpop.f32.mrb[0].mxu0
    %586 = vdwg.mxu0
    %v587 = vmax.f32 %v582, 0.0
    %v588 = vpack.c.bf16 %v587, %v587
    %s589 = scalar_lea.vmem [#allocation2], 320
    %v590 = vld [vmem:[%s589] sm:$0xf]
    %v591 = vld [vmem:[%s589 + $0x4] sm:$0xf]
    %v592 = vld [vmem:[%s589 + $0x8] sm:$0xf]
    %v593 = vld [vmem:[%s589 + $0xc] sm:$0xf]
    %v594 = vld [vmem:[%s589 + $0x10] sm:$0xf]
    %v595 = vld [vmem:[%s589 + $0x14] sm:$0xf]
    %v596 = vld [vmem:[%s589 + $0x18] sm:$0xf]
    %v597 = vld [vmem:[%s589 + $0x1c] sm:$0xf]
    %v598 = vld [vmem:[%s589 + $0x20] sm:$0xf]
    %v599 = vld [vmem:[%s589 + $0x24] sm:$0xf]
    %v600 = vld [vmem:[%s589 + $0x28] sm:$0xf]
    %v601 = vld [vmem:[%s589 + $0x2c] sm:$0xf]
    %v602 = vld [vmem:[%s589 + $0x30] sm:$0xf]
    %v603 = vld [vmem:[%s589 + $0x34] sm:$0xf]
    %v604 = vld [vmem:[%s589 + $0x38] sm:$0xf]
    %v605 = vld [vmem:[%s589 + $0x3c] sm:$0xf]
    %v606 = vld [vmem:[%s2 + $0x5] sm:$0x1]
    %v607 = vlaneseq
    %v608 = vshrl.u32 %v607, 7
    %v609 = vsub.s32 0, %v608
    %v610 = vrot.slane %v606, %v609
    %v627 = vunpack.c.l.b16 %v590
    %v628 = vunpack.c.l.b16 %v591
    %v629 = vunpack.c.l.b16 %v592
    %v630 = vunpack.c.l.b16 %v593
    %v631 = vunpack.c.l.b16 %v594
    %v632 = vunpack.c.l.b16 %v595
    %v633 = vunpack.c.l.b16 %v596
    %v634 = vunpack.c.l.b16 %v597
    %v635 = vunpack.c.l.b16 %v598
    %v636 = vunpack.c.l.b16 %v599
    %v637 = vunpack.c.l.b16 %v600
    %v638 = vunpack.c.l.b16 %v601
    %v639 = vunpack.c.l.b16 %v602
    %v640 = vunpack.c.l.b16 %v603
    %v641 = vunpack.c.l.b16 %v604
    %v642 = vunpack.c.l.b16 %v605
    %v643 = vpack.c.b16 %v628, %v627
    %v644 = vpack.c.b16 %v630, %v629
    %v645 = vpack.c.b16 %v632, %v631
    %v646 = vpack.c.b16 %v634, %v633
    %v647 = vpack.c.b16 %v636, %v635
    %v648 = vpack.c.b16 %v638, %v637
    %v649 = vpack.c.b16 %v640, %v639
    %v650 = vpack.c.b16 %v642, %v641
    %659 = vmatprep.subr.bf16.mxu0 0
    %660 = vmatpush1.bf16.msra.mxu0 %v643
    %661 = vmatprep.subr.bf16.mxu0 0
    %662 = vmatpush1.bf16.msra.mxu0 %v644
    %663 = vmatprep.subr.bf16.mxu0 0
    %664 = vmatpush1.bf16.msra.mxu0 %v645
    %665 = vmatprep.subr.bf16.mxu0 0
    %666 = vmatpush1.bf16.msra.mxu0 %v646
    %667 = vmatprep.subr.bf16.mxu0 0
    %668 = vmatpush1.bf16.msra.mxu0 %v647
    %669 = vmatprep.subr.bf16.mxu0 0
    %670 = vmatpush1.bf16.msra.mxu0 %v648
    %671 = vmatprep.subr.bf16.mxu0 0
    %672 = vmatpush1.bf16.msra.mxu0 %v649
    %673 = vmatprep.subr.bf16.mxu0 0
    %674 = vmatpush1.bf16.msra.mxu0 %v650
    %675 = vmatprep.subr.bf16.mxu0 0
    %676 = vmatpush1.bf16.msra.mxu0 0
    %677 = vmatprep.subr.bf16.mxu0 0
    %678 = vmatpush1.bf16.msra.mxu0 0
    %679 = vmatprep.subr.bf16.mxu0 0
    %680 = vmatpush1.bf16.msra.mxu0 0
    %681 = vmatprep.subr.bf16.mxu0 0
    %682 = vmatpush1.bf16.msra.mxu0 0
    %683 = vmatprep.subr.bf16.mxu0 0
    %684 = vmatpush1.bf16.msra.mxu0 0
    %685 = vmatprep.subr.bf16.mxu0 0
    %686 = vmatpush1.bf16.msra.mxu0 0
    %687 = vmatprep.subr.bf16.mxu0 0
    %688 = vmatpush1.bf16.msra.mxu0 0
    %689 = vmatprep.subr.bf16.mxu0 0
    %690 = vmatpush1.bf16.msra.mxu0 0
    %691 = vmatprep.mubr.bf16.mxu0 0
    %692 = vmatmul.mubr.bf16.gmra.mrb[0].mxu0 %v588
    %v693 = vpop.f32.mrb[0].mxu0
    %v694 = vadd.f32 %v610, %v693
    %v695 = vpop.f32.mrb[0].mxu0
    %v696 = vpop.f32.mrb[0].mxu0
    %v697 = vpop.f32.mrb[0].mxu0
    %698 = vdwg.mxu0
    %699 = vst [vmem:[%s3] sm:$0xff] %v694
    // Predicated region
    $region18: #{amio_forward.1} parent=1 // pred_check
      _
    $region19: #{amio_forward.1} parent=1 // pred_check_branch
      %701 = sbr.rel (0) target = $region21
    $region20: #{amio_forward.1} parent=1 // pred_region
      _
    $region21: #{amio_forward.1} parent=1 // pred_fallthru
      _
    // Predicated region
    $region22: #{amio_forward.1} parent=1 // pred_check
      _
    $region23: #{amio_forward.1} parent=1 // pred_check_branch
      %703 = sbr.rel (0) target = $region25
    $region24: #{amio_forward.1} parent=1 // pred_region
      _
    $region25: #{amio_forward.1} parent=1 // pred_fallthru
      _
    %704 = vsyncpa [#allocation3], 1

</llo_original>
